<compile_context>
chip_gen: v7x
topology: tpu7x:2x2x1
jax: 0.10.0
libtpu: 0.0.40
codegen_flags: <defaults>
</compile_context>

<pallas_src>
import functools
import math

import jax
import jax.numpy as jnp
from jax import lax
from jax.experimental import pallas as pl
from jax.experimental.pallas import tpu as pltpu


def _round_up(x: int, m: int) -> int:
    return ((x + m - 1) // m) * m


def _vmem_budget_bytes() -> int:
    """Conservative usable-VMEM budget (leaves headroom; safe on v5e/v6e/v7x)."""
    cap = 64 << 20  # conservative fallback = v7x physical VMEM
    try:
        info = pltpu.get_tpu_info()
        cap = int(getattr(info, "vmem_capacity_bytes", cap))
    except Exception:
        pass
    return max(24 << 20, min(int(cap * 0.72), 100 << 20))


# --------------------------------------------------------------------------- #
# pass 1: row L2 normalize; emit f32 copy + MXU operand with 1/sqrt(T) folded #
# --------------------------------------------------------------------------- #
def _normalize_kernel(x_ref, en_ref, es_ref, *, inv_sqrt_temp):
    x = x_ref[...]                                              # (Bn, Dp) f32
    ss = jnp.sum(x * x, axis=1, keepdims=True)                  # (Bn, 1)
    inv = lax.rsqrt(jnp.maximum(ss, jnp.float32(1e-24)))        # == 1/max(||x||,1e-12)
    e = x * inv
    en_ref[...] = e                                             # f32 normalized
    es_ref[...] = (e * jnp.float32(inv_sqrt_temp)).astype(es_ref.dtype)


# --------------------------------------------------------------------------- #
# pass 2: tiled similarity + online sum-exp -> per-row logsumexp              #
# --------------------------------------------------------------------------- #
def _sumexp_kernel(er_ref, ec_ref, lse_ref, acc_ref, *,
                   inv_temp, batch, block_r, block_c, col_resident):
    i = pl.program_id(0)          # row block     ("parallel")
    j = pl.program_id(1)          # column block  ("arbitrary" reduction axis)

    @pl.when(j == 0)
    def _init():
        acc_ref[...] = jnp.zeros_like(acc_ref)

    col_start = pl.multiple_of(j * block_c, block_c)
    if col_resident:
        # whole column operand lives in VMEM; slice the current tile.
        ec = ec_ref[pl.ds(col_start, block_c), :]
    else:
        ec = ec_ref[...]

    # (Br, Bc) tile of sim/T; temperature is folded into the operands,
    # f32 accumulation on the MXU.
    s = lax.dot_general(
        er_ref[...], ec,
        dimension_numbers=(((1,), (1,)), ((), ())),
        preferred_element_type=jnp.float32,
    )
    m = jnp.float32(inv_temp)          # exact upper bound (unit-norm self-sim)
    p = jnp.exp(s - m)

    row_start = i * block_r
    touches_diag = jnp.logical_and(row_start < col_start + block_c,
                                   col_start < row_start + block_r)
    touches_pad = (col_start + block_c) > batch
    needs_mask = jnp.logical_or(touches_diag, touches_pad)

    @pl.when(needs_mask)
    def _masked():
        row_ids = row_start + lax.broadcasted_iota(jnp.int32, (block_r, 1), 0)
        col_ids = col_start + lax.broadcasted_iota(jnp.int32, (1, block_c), 1)
        keep = jnp.logical_and(row_ids != col_ids, col_ids < batch)
        acc_ref[...] += jnp.sum(jnp.where(keep, p, jnp.float32(0.0)),
                                axis=1, keepdims=True)

    @pl.when(jnp.logical_not(needs_mask))
    def _plain():
        acc_ref[...] += jnp.sum(p, axis=1, keepdims=True)

    @pl.when(j == pl.num_programs(1) - 1)
    def _finalize():
        # guard log(0) for degenerate rows (B==1 / fully padded); discarded later.
        lse_ref[...] = m + jnp.log(jnp.maximum(acc_ref[...], jnp.float32(1e-30)))


# --------------------------------------------------------------------------- #
# wrapper                                                                     #
# --------------------------------------------------------------------------- #
def contrastive_loss(embeddings, labels, margin: float = 0.5,
                     temperature: float = 0.1, mxu_dtype=None):
    """Pallas TPU forward of ContrastiveLoss.

    embeddings: (B, D) float, labels: (B,) int.
    `margin` is unused by the reference forward pass (API parity only).
    """
    del margin  # unused by the reference forward pass
    B, D = embeddings.shape
    D_pad = max(128, _round_up(D, 128))
    B_pad = _round_up(max(B, 1), 512)          # multiple of 512 -> big MXU tiles

    if mxu_dtype is None:
        # f32 operands are accuracy-free when the kernel is VPU/EUP-bound (small D);
        # bf16 for large D where the MXU matters.
        mxu_dtype = jnp.float32 if D_pad <= 512 else jnp.bfloat16
    esz = jnp.dtype(mxu_dtype).itemsize
    budget = _vmem_budget_bytes()

    emb = jnp.pad(embeddings.astype(jnp.float32),
                  ((0, B_pad - B), (0, D_pad - D)))

    # --- pass 1: normalize once ----------------------------------------------
    bytes_per_row = D_pad * (4 + 4 + esz) * 2   # in + f32 out + scaled out, x2 buffers
    block_n = 512
    while block_n > 128 and block_n * bytes_per_row > (12 << 20):
        block_n //= 2
    e_norm, e_scaled = pl.pallas_call(
        functools.partial(_normalize_kernel,
                          inv_sqrt_temp=float(1.0 / math.sqrt(temperature))),
        out_shape=(jax.ShapeDtypeStruct((B_pad, D_pad), jnp.float32),
                   jax.ShapeDtypeStruct((B_pad, D_pad), mxu_dtype)),
        grid_spec=pltpu.PrefetchScalarGridSpec(
            num_scalar_prefetch=0,
            grid=(B_pad // block_n,),
            in_specs=[pl.BlockSpec((block_n, D_pad), lambda i: (i, 0))],
            out_specs=[pl.BlockSpec((block_n, D_pad), lambda i: (i, 0)),
                       pl.BlockSpec((block_n, D_pad), lambda i: (i, 0))]),
        compiler_params=pltpu.CompilerParams(
            dimension_semantics=("parallel",),
            vmem_limit_bytes=min(budget, 32 << 20)),
    )(emb)

    # --- hoisted positive-pair terms (O(B*D), wrapper-side per perf review) ---
    e_n = e_norm[:B]                                            # (B, D_pad) f32
    lab = labels.astype(jnp.int32)
    _, inv_idx = jnp.unique(lab, size=B, return_inverse=True)   # dense class ids
    counts = jax.ops.segment_sum(jnp.ones((B,), jnp.float32), inv_idx,
                                 num_segments=B)                # (B,)
    class_sums = jax.ops.segment_sum(e_n, inv_idx, num_segments=B)  # (B, D_pad)
    poscnt = counts[inv_idx] - 1.0                              # (B,)
    self_dot = jnp.sum(e_n * e_n, axis=1)                       # ~1 (exact self-sim)
    possim = (jnp.sum(e_n * class_sums[inv_idx], axis=1) - self_dot) / temperature

    # --- tiling / residency decision ------------------------------------------
    col_resident = (2 * B_pad * D_pad * esz          # column operand (assume 2 bufs)
                    + 2 * 256 * D_pad * esz          # row operand double-buffer
                    + 4 * 256 * 512                  # f32 sim tile
                    + (2 << 20)) <= budget
    if col_resident:
        block_r, block_c = 256, 512
    else:
        block_r, block_c = 128, 128
        for cr, cc in ((1024, 512), (512, 512), (512, 256), (256, 512), (256, 256)):
            if (B_pad % cr) or (B_pad % cc):
                continue
            if cr > 256 and cr * 2 > B_pad:          # keep >=2 row blocks (v7x 2 TCs)
                continue
            need = 2 * (cr + cc) * D_pad * esz + 4 * cr * cc + (2 << 20)
            if need <= budget:
                block_r, block_c = cr, cc
                break

    if col_resident:
        col_spec = pl.BlockSpec((B_pad, D_pad), lambda i, j: (0, 0))   # loaded once
    else:
        col_spec = pl.BlockSpec((block_c, D_pad), lambda i, j: (j, 0))

    main_kernel = functools.partial(
        _sumexp_kernel,
        inv_temp=float(1.0 / temperature), batch=B,
        block_r=block_r, block_c=block_c, col_resident=col_resident)

    per_row_lse = pl.pallas_call(
        main_kernel,
        out_shape=jax.ShapeDtypeStruct((B_pad, 1), jnp.float32),
        grid_spec=pltpu.PrefetchScalarGridSpec(
            num_scalar_prefetch=0,
            grid=(B_pad // block_r, B_pad // block_c),
            in_specs=[pl.BlockSpec((block_r, D_pad), lambda i, j: (i, 0)),
                      col_spec],
            out_specs=pl.BlockSpec((block_r, 1), lambda i, j: (i, 0)),
            scratch_shapes=[pltpu.VMEM((block_r, 1), jnp.float32)]),
        compiler_params=pltpu.CompilerParams(
            dimension_semantics=("parallel", "arbitrary"),
            vmem_limit_bytes=budget),
    )(e_scaled, e_scaled)

    lse = per_row_lse[:B, 0]
    row_loss = jnp.where(poscnt > 0.0, poscnt * lse - possim, jnp.float32(0.0))
    return jnp.sum(row_loss) / jnp.float32(B)


# --------------------------------------------------------------------------- #
# pure-JAX f32 reference (mirrors the torch loop analytically)                #
# --------------------------------------------------------------------------- #
def _reference_loss(embeddings, labels, temperature=0.1):
    e = embeddings.astype(jnp.float32)
    e = e / jnp.maximum(jnp.linalg.norm(e, axis=1, keepdims=True), 1e-12)
    sim = (e @ e.T) / temperature
    B = labels.shape[0]
    off_diag = ~jnp.eye(B, dtype=bool)
    mask_pos = (labels[:, None] == labels[None, :]) & off_diag
    sim_off = jnp.where(off_diag, sim, -jnp.inf)
    lse = jax.scipy.special.logsumexp(sim_off, axis=1, keepdims=True)
    per_pair = jnp.where(mask_pos, lse - sim, 0.0)
    return jnp.sum(per_pair) / B


if __name__ == "__main__":
    key = jax.random.PRNGKey(0)
    k_emb, k_lab = jax.random.split(key)

    B, D = 8, 32
    embeddings = jax.random.normal(k_emb, (B, D), dtype=jnp.float32)
    labels = jax.random.randint(k_lab, (B,), 0, 3, dtype=jnp.int32)

    ref = _reference_loss(embeddings, labels, temperature=0.1)

    # auto path (f32 MXU operands at this small D)
    loss = contrastive_loss(embeddings, labels, margin=0.5, temperature=0.1)
    loss = jax.block_until_ready(loss)
    assert bool(jnp.isfinite(loss)), loss
    assert jnp.allclose(loss, ref, rtol=2e-2, atol=2e-2), (loss, ref)

    # forced-bf16 path (what large-D problems use); looser tolerance
    loss_bf16 = contrastive_loss(embeddings, labels, margin=0.5, temperature=0.1,
                                 mxu_dtype=jnp.bfloat16)
    loss_bf16 = jax.block_until_ready(loss_bf16)
    assert bool(jnp.isfinite(loss_bf16)), loss_bf16
    assert jnp.allclose(loss_bf16, ref, rtol=5e-2, atol=5e-2), (loss_bf16, ref)

    print("KERNEL_OK")
</pallas_src>

<mosaic_0001>
module attributes {stable_mosaic.version = 11 : i64} {
  func.func @_normalize_kernel(%arg0: i32, %arg1: memref<512x128xf32, #tpu.memory_space<vmem>>, %arg2: memref<512x128xf32, #tpu.memory_space<vmem>>, %arg3: memref<512x128xf32, #tpu.memory_space<vmem>>) attributes {dimension_semantics = [#tpu.dimension_semantics<parallel>], iteration_bounds = array<i64: 1>, scalar_prefetch = 0 : i64, scratch_operands = 0 : i64, tpu.core_type = #tpu.core_type<tc>, window_params = [{transform_indices = @transform_0, window_bounds = array<i64: 512, 128>}, {transform_indices = @transform_1, window_bounds = array<i64: 512, 128>}, {transform_indices = @transform_2, window_bounds = array<i64: 512, 128>}]} {
    %c0 = arith.constant 0 : index
    %c0_0 = arith.constant 0 : index
    %0 = vector.load %arg1[%c0, %c0_0] : memref<512x128xf32, #tpu.memory_space<vmem>>, vector<512x128xf32>
    %1 = arith.mulf %0, %0 : vector<512x128xf32>
    %cst = arith.constant dense<0.000000e+00> : vector<512xf32>
    %2 = vector.multi_reduction <add>, %1, %cst [1] : vector<512x128xf32> to vector<512xf32>
    %3 = vector.shape_cast %2 : vector<512xf32> to vector<512x1xf32>
    %cst_1 = arith.constant 1.000000e-24 : f32
    %4 = vector.broadcast %cst_1 : f32 to vector<512x1xf32>
    %5 = arith.maximumf %3, %4 : vector<512x1xf32>
    %6 = math.rsqrt %5 : vector<512x1xf32>
    %7 = vector.broadcast %6 : vector<512x1xf32> to vector<512x128xf32>
    %8 = arith.mulf %0, %7 : vector<512x128xf32>
    %c0_2 = arith.constant 0 : index
    %c0_3 = arith.constant 0 : index
    %9 = vector.load %arg2[%c0_2, %c0_3] : memref<512x128xf32, #tpu.memory_space<vmem>>, vector<512x128xf32>
    tpu.vector_store %arg2[%c0_2, %c0_3], %8 {strides = array<i32>} : memref<512x128xf32, #tpu.memory_space<vmem>>, vector<512x128xf32>,
    %cst_4 = arith.constant 3.1622777 : f32
    %10 = vector.broadcast %cst_4 : f32 to vector<512x128xf32>
    %11 = arith.mulf %8, %10 : vector<512x128xf32>
    %c0_5 = arith.constant 0 : index
    %c0_6 = arith.constant 0 : index
    %12 = vector.load %arg3[%c0_5, %c0_6] : memref<512x128xf32, #tpu.memory_space<vmem>>, vector<512x128xf32>
    tpu.vector_store %arg3[%c0_5, %c0_6], %11 {strides = array<i32>} : memref<512x128xf32, #tpu.memory_space<vmem>>, vector<512x128xf32>,
    return
  }
  func.func @transform_0(%arg0: i32) -> (i32, i32) {
    %c0_i32 = arith.constant 0 : i32
    %c0_i32_0 = arith.constant 0 : i32
    return %arg0, %c0_i32 : i32, i32
  }
  func.func @transform_1(%arg0: i32) -> (i32, i32) {
    %c0_i32 = arith.constant 0 : i32
    %c0_i32_0 = arith.constant 0 : i32
    return %arg0, %c0_i32 : i32, i32
  }
  func.func @transform_2(%arg0: i32) -> (i32, i32) {
    %c0_i32 = arith.constant 0 : i32
    %c0_i32_0 = arith.constant 0 : i32
    return %arg0, %c0_i32 : i32, i32
  }
}

</mosaic_0001>

<llo_original>
// kernel: tpu_custom_call.1
$region0: #{tpu_custom_call.1}
  #allocation0 [shape = 'u32[]', space=smem, size = 0x4, offset = 0x4, fixed_abs, tag = 'smem constant byte address 0x4 - core index']
  #allocation1 [shape = 'u32[144,128]{1,0:T(1,128)}', space=vmem, size = 0x12000, scoped, tag = 'internal scratch']
  %s0 = inlined_call_operand.hbm [shape: f32[512,128], index: 0, kind: input, shape index: {}]
  %s1 = inlined_call_operand.hbm [shape: f32[512,128], index: 1, kind: output, shape index: {0}]
  %s2 = inlined_call_operand.hbm [shape: f32[512,128], index: 2, kind: output, shape index: {1}]
  %3 = xla_tuple %s1, %s2
  %s4 = sld [smem:[#allocation0]]
  $region26: #{tpu_custom_call.1} parent=0
    _
  %s6 = ssub.s32 1, %s4
  %s7 = scalar_select 0, %s6, %s4
  $region1: #{tpu_custom_call.1} parent=0
    #allocation2 [shape = 'u8[262144]{0}', space=vmem, size = 0x40000, scoped, tag = 'input window, operand 0, single buffered']
    #allocation3 [shape = 's32[1]{0}', space=sflag, size = 0x4, scoped, tag = 'scoped memory for tpu_custom_call.1']
    #allocation4 [shape = 's32[1]{0}', space=sflag, size = 0x4, scoped, tag = 'scoped memory for tpu_custom_call.1']
    #allocation5 [shape = 'u8[262144]{0}', space=vmem, size = 0x40000, scoped, tag = 'output window, operand 0, single buffered']
    #allocation6 [shape = 'u8[262144]{0}', space=vmem, size = 0x40000, scoped, tag = 'output window, operand 1, single buffered']
    #allocation7 [shape = 's32[1]{0}', space=sflag, size = 0x4, scoped, tag = 'scoped memory for tpu_custom_call.1']
    %8 = vsyncpa [#allocation3], 0
    %9 = vsyncpa [#allocation4], 0
    %10 = vsyncpa [#allocation7], 0
    // Predicated region
    $region2: #{tpu_custom_call.1} parent=1 // pred_check
      _
    $region3: #{tpu_custom_call.1} parent=1 // pred_check_branch
      %12 = sbr.rel (0) target = $region5
    $region4: #{tpu_custom_call.1} parent=1 // pred_region
      %s14 = ssub.s32 8192, 8192
      %15 = vsyncadd [#allocation3], %s14
      %s16 = sshll.u32 [#allocation2], 4
      %s17 = int_to_ptr.vmem [resolvable:$true] %s16
      %22 = dma.hbm_to_vmem [thread:$0]  %s0, 8192, %s17, [#allocation3], 128, 128, 8
    $region5: #{tpu_custom_call.1} parent=1 // pred_fallthru
      _
    // Predicated region
    $region6: #{tpu_custom_call.1} parent=1 // pred_check
      _
    $region7: #{tpu_custom_call.1} parent=1 // pred_check_branch
      %24 = sbr.rel (0) target = $region9
    $region8: #{tpu_custom_call.1} parent=1 // pred_region
      %25 = dma.done [#allocation3], 8192
    $region9: #{tpu_custom_call.1} parent=1 // pred_fallthru
      _
    %v26 = vld [vmem:[#allocation2] sm:$0xff]
    %v27 = vld [vmem:[#allocation2 + $0x8] sm:$0xff]
    %v28 = vld [vmem:[#allocation2 + $0x10] sm:$0xff]
    %v29 = vld [vmem:[#allocation2 + $0x18] sm:$0xff]
    %v30 = vld [vmem:[#allocation2 + $0x20] sm:$0xff]
    %v31 = vld [vmem:[#allocation2 + $0x28] sm:$0xff]
    %v32 = vld [vmem:[#allocation2 + $0x30] sm:$0xff]
    %v33 = vld [vmem:[#allocation2 + $0x38] sm:$0xff]
    %v34 = vld [vmem:[#allocation2 + $0x40] sm:$0xff]
    %v35 = vld [vmem:[#allocation2 + $0x48] sm:$0xff]
    %v36 = vld [vmem:[#allocation2 + $0x50] sm:$0xff]
    %v37 = vld [vmem:[#allocation2 + $0x58] sm:$0xff]
    %v38 = vld [vmem:[#allocation2 + $0x60] sm:$0xff]
    %v39 = vld [vmem:[#allocation2 + $0x68] sm:$0xff]
    %v40 = vld [vmem:[#allocation2 + $0x70] sm:$0xff]
    %v41 = vld [vmem:[#allocation2 + $0x78] sm:$0xff]
    %v42 = vld [vmem:[#allocation2 + $0x80] sm:$0xff]
    %v43 = vld [vmem:[#allocation2 + $0x88] sm:$0xff]
    %v44 = vld [vmem:[#allocation2 + $0x90] sm:$0xff]
    %v45 = vld [vmem:[#allocation2 + $0x98] sm:$0xff]
    %v46 = vld [vmem:[#allocation2 + $0xa0] sm:$0xff]
    %v47 = vld [vmem:[#allocation2 + $0xa8] sm:$0xff]
    %v48 = vld [vmem:[#allocation2 + $0xb0] sm:$0xff]
    %v49 = vld [vmem:[#allocation2 + $0xb8] sm:$0xff]
    %v50 = vld [vmem:[#allocation2 + $0xc0] sm:$0xff]
    %v51 = vld [vmem:[#allocation2 + $0xc8] sm:$0xff]
    %v52 = vld [vmem:[#allocation2 + $0xd0] sm:$0xff]
    %v53 = vld [vmem:[#allocation2 + $0xd8] sm:$0xff]
    %v54 = vld [vmem:[#allocation2 + $0xe0] sm:$0xff]
    %v55 = vld [vmem:[#allocation2 + $0xe8] sm:$0xff]
    %v56 = vld [vmem:[#allocation2 + $0xf0] sm:$0xff]
    %v57 = vld [vmem:[#allocation2 + $0xf8] sm:$0xff]
    %v58 = vld [vmem:[#allocation2 + $0x100] sm:$0xff]
    %v59 = vld [vmem:[#allocation2 + $0x108] sm:$0xff]
    %v60 = vld [vmem:[#allocation2 + $0x110] sm:$0xff]
    %v61 = vld [vmem:[#allocation2 + $0x118] sm:$0xff]
    %v62 = vld [vmem:[#allocation2 + $0x120] sm:$0xff]
    %v63 = vld [vmem:[#allocation2 + $0x128] sm:$0xff]
    %v64 = vld [vmem:[#allocation2 + $0x130] sm:$0xff]
    %v65 = vld [vmem:[#allocation2 + $0x138] sm:$0xff]
    %v66 = vld [vmem:[#allocation2 + $0x140] sm:$0xff]
    %v67 = vld [vmem:[#allocation2 + $0x148] sm:$0xff]
    %v68 = vld [vmem:[#allocation2 + $0x150] sm:$0xff]
    %v69 = vld [vmem:[#allocation2 + $0x158] sm:$0xff]
    %v70 = vld [vmem:[#allocation2 + $0x160] sm:$0xff]
    %v71 = vld [vmem:[#allocation2 + $0x168] sm:$0xff]
    %v72 = vld [vmem:[#allocation2 + $0x170] sm:$0xff]
    %v73 = vld [vmem:[#allocation2 + $0x178] sm:$0xff]
    %v74 = vld [vmem:[#allocation2 + $0x180] sm:$0xff]
    %v75 = vld [vmem:[#allocation2 + $0x188] sm:$0xff]
    %v76 = vld [vmem:[#allocation2 + $0x190] sm:$0xff]
    %v77 = vld [vmem:[#allocation2 + $0x198] sm:$0xff]
    %v78 = vld [vmem:[#allocation2 + $0x1a0] sm:$0xff]
    %v79 = vld [vmem:[#allocation2 + $0x1a8] sm:$0xff]
    %v80 = vld [vmem:[#allocation2 + $0x1b0] sm:$0xff]
    %v81 = vld [vmem:[#allocation2 + $0x1b8] sm:$0xff]
    %v82 = vld [vmem:[#allocation2 + $0x1c0] sm:$0xff]
    %v83 = vld [vmem:[#allocation2 + $0x1c8] sm:$0xff]
    %v84 = vld [vmem:[#allocation2 + $0x1d0] sm:$0xff]
    %v85 = vld [vmem:[#allocation2 + $0x1d8] sm:$0xff]
    %v86 = vld [vmem:[#allocation2 + $0x1e0] sm:$0xff]
    %v87 = vld [vmem:[#allocation2 + $0x1e8] sm:$0xff]
    %v88 = vld [vmem:[#allocation2 + $0x1f0] sm:$0xff]
    %v89 = vld [vmem:[#allocation2 + $0x1f8] sm:$0xff]
    %v90 = vmul.f32 %v26, %v26
    %v91 = vmul.f32 %v27, %v27
    %v92 = vmul.f32 %v28, %v28
    %v93 = vmul.f32 %v29, %v29
    %v94 = vmul.f32 %v30, %v30
    %v95 = vmul.f32 %v31, %v31
    %v96 = vmul.f32 %v32, %v32
    %v97 = vmul.f32 %v33, %v33
    %v98 = vmul.f32 %v34, %v34
    %v99 = vmul.f32 %v35, %v35
    %v100 = vmul.f32 %v36, %v36
    %v101 = vmul.f32 %v37, %v37
    %v102 = vmul.f32 %v38, %v38
    %v103 = vmul.f32 %v39, %v39
    %v104 = vmul.f32 %v40, %v40
    %v105 = vmul.f32 %v41, %v41
    %v106 = vmul.f32 %v42, %v42
    %v107 = vmul.f32 %v43, %v43
    %v108 = vmul.f32 %v44, %v44
    %v109 = vmul.f32 %v45, %v45
    %v110 = vmul.f32 %v46, %v46
    %v111 = vmul.f32 %v47, %v47
    %v112 = vmul.f32 %v48, %v48
    %v113 = vmul.f32 %v49, %v49
    %v114 = vmul.f32 %v50, %v50
    %v115 = vmul.f32 %v51, %v51
    %v116 = vmul.f32 %v52, %v52
    %v117 = vmul.f32 %v53, %v53
    %v118 = vmul.f32 %v54, %v54
    %v119 = vmul.f32 %v55, %v55
    %v120 = vmul.f32 %v56, %v56
    %v121 = vmul.f32 %v57, %v57
    %v122 = vmul.f32 %v58, %v58
    %v123 = vmul.f32 %v59, %v59
    %v124 = vmul.f32 %v60, %v60
    %v125 = vmul.f32 %v61, %v61
    %v126 = vmul.f32 %v62, %v62
    %v127 = vmul.f32 %v63, %v63
    %v128 = vmul.f32 %v64, %v64
    %v129 = vmul.f32 %v65, %v65
    %v130 = vmul.f32 %v66, %v66
    %v131 = vmul.f32 %v67, %v67
    %v132 = vmul.f32 %v68, %v68
    %v133 = vmul.f32 %v69, %v69
    %v134 = vmul.f32 %v70, %v70
    %v135 = vmul.f32 %v71, %v71
    %v136 = vmul.f32 %v72, %v72
    %v137 = vmul.f32 %v73, %v73
    %v138 = vmul.f32 %v74, %v74
    %v139 = vmul.f32 %v75, %v75
    %v140 = vmul.f32 %v76, %v76
    %v141 = vmul.f32 %v77, %v77
    %v142 = vmul.f32 %v78, %v78
    %v143 = vmul.f32 %v79, %v79
    %v144 = vmul.f32 %v80, %v80
    %v145 = vmul.f32 %v81, %v81
    %v146 = vmul.f32 %v82, %v82
    %v147 = vmul.f32 %v83, %v83
    %v148 = vmul.f32 %v84, %v84
    %v149 = vmul.f32 %v85, %v85
    %v150 = vmul.f32 %v86, %v86
    %v151 = vmul.f32 %v87, %v87
    %v152 = vmul.f32 %v88, %v88
    %v153 = vmul.f32 %v89, %v89
    %154 = vadd.xlane.f32.xlu0 %v90
    %v155 = vpop.xlane.xlu0 %154
    %156 = vadd.xlane.f32.xlu0 %v91
    %v157 = vpop.xlane.xlu0 %156
    %158 = vadd.xlane.f32.xlu0 %v92
    %v159 = vpop.xlane.xlu0 %158
    %160 = vadd.xlane.f32.xlu0 %v93
    %v161 = vpop.xlane.xlu0 %160
    %162 = vadd.xlane.f32.xlu0 %v94
    %v163 = vpop.xlane.xlu0 %162
    %164 = vadd.xlane.f32.xlu0 %v95
    %v165 = vpop.xlane.xlu0 %164
    %166 = vadd.xlane.f32.xlu0 %v96
    %v167 = vpop.xlane.xlu0 %166
    %168 = vadd.xlane.f32.xlu0 %v97
    %v169 = vpop.xlane.xlu0 %168
    %170 = vadd.xlane.f32.xlu0 %v98
    %v171 = vpop.xlane.xlu0 %170
    %172 = vadd.xlane.f32.xlu0 %v99
    %v173 = vpop.xlane.xlu0 %172
    %174 = vadd.xlane.f32.xlu0 %v100
    %v175 = vpop.xlane.xlu0 %174
    %176 = vadd.xlane.f32.xlu0 %v101
    %v177 = vpop.xlane.xlu0 %176
    %178 = vadd.xlane.f32.xlu0 %v102
    %v179 = vpop.xlane.xlu0 %178
    %180 = vadd.xlane.f32.xlu0 %v103
    %v181 = vpop.xlane.xlu0 %180
    %182 = vadd.xlane.f32.xlu0 %v104
    %v183 = vpop.xlane.xlu0 %182
    %184 = vadd.xlane.f32.xlu0 %v105
    %v185 = vpop.xlane.xlu0 %184
    %186 = vadd.xlane.f32.xlu0 %v106
    %v187 = vpop.xlane.xlu0 %186
    %188 = vadd.xlane.f32.xlu0 %v107
    %v189 = vpop.xlane.xlu0 %188
    %190 = vadd.xlane.f32.xlu0 %v108
    %v191 = vpop.xlane.xlu0 %190
    %192 = vadd.xlane.f32.xlu0 %v109
    %v193 = vpop.xlane.xlu0 %192
    %194 = vadd.xlane.f32.xlu0 %v110
    %v195 = vpop.xlane.xlu0 %194
    %196 = vadd.xlane.f32.xlu0 %v111
    %v197 = vpop.xlane.xlu0 %196
    %198 = vadd.xlane.f32.xlu0 %v112
    %v199 = vpop.xlane.xlu0 %198
    %200 = vadd.xlane.f32.xlu0 %v113
    %v201 = vpop.xlane.xlu0 %200
    %202 = vadd.xlane.f32.xlu0 %v114
    %v203 = vpop.xlane.xlu0 %202
    %204 = vadd.xlane.f32.xlu0 %v115
    %v205 = vpop.xlane.xlu0 %204
    %206 = vadd.xlane.f32.xlu0 %v116
    %v207 = vpop.xlane.xlu0 %206
    %208 = vadd.xlane.f32.xlu0 %v117
    %v209 = vpop.xlane.xlu0 %208
    %210 = vadd.xlane.f32.xlu0 %v118
    %v211 = vpop.xlane.xlu0 %210
    %212 = vadd.xlane.f32.xlu0 %v119
    %v213 = vpop.xlane.xlu0 %212
    %214 = vadd.xlane.f32.xlu0 %v120
    %v215 = vpop.xlane.xlu0 %214
    %216 = vadd.xlane.f32.xlu0 %v121
    %v217 = vpop.xlane.xlu0 %216
    %218 = vadd.xlane.f32.xlu0 %v122
    %v219 = vpop.xlane.xlu0 %218
    %220 = vadd.xlane.f32.xlu0 %v123
    %v221 = vpop.xlane.xlu0 %220
    %222 = vadd.xlane.f32.xlu0 %v124
    %v223 = vpop.xlane.xlu0 %222
    %224 = vadd.xlane.f32.xlu0 %v125
    %v225 = vpop.xlane.xlu0 %224
    %226 = vadd.xlane.f32.xlu0 %v126
    %v227 = vpop.xlane.xlu0 %226
    %228 = vadd.xlane.f32.xlu0 %v127
    %v229 = vpop.xlane.xlu0 %228
    %230 = vadd.xlane.f32.xlu0 %v128
    %v231 = vpop.xlane.xlu0 %230
    %232 = vadd.xlane.f32.xlu0 %v129
    %v233 = vpop.xlane.xlu0 %232
    %234 = vadd.xlane.f32.xlu0 %v130
    %v235 = vpop.xlane.xlu0 %234
    %236 = vadd.xlane.f32.xlu0 %v131
    %v237 = vpop.xlane.xlu0 %236
    %238 = vadd.xlane.f32.xlu0 %v132
    %v239 = vpop.xlane.xlu0 %238
    %240 = vadd.xlane.f32.xlu0 %v133
    %v241 = vpop.xlane.xlu0 %240
    %242 = vadd.xlane.f32.xlu0 %v134
    %v243 = vpop.xlane.xlu0 %242
    %244 = vadd.xlane.f32.xlu0 %v135
    %v245 = vpop.xlane.xlu0 %244
    %246 = vadd.xlane.f32.xlu0 %v136
    %v247 = vpop.xlane.xlu0 %246
    %248 = vadd.xlane.f32.xlu0 %v137
    %v249 = vpop.xlane.xlu0 %248
    %250 = vadd.xlane.f32.xlu0 %v138
    %v251 = vpop.xlane.xlu0 %250
    %252 = vadd.xlane.f32.xlu0 %v139
    %v253 = vpop.xlane.xlu0 %252
    %254 = vadd.xlane.f32.xlu0 %v140
    %v255 = vpop.xlane.xlu0 %254
    %256 = vadd.xlane.f32.xlu0 %v141
    %v257 = vpop.xlane.xlu0 %256
    %258 = vadd.xlane.f32.xlu0 %v142
    %v259 = vpop.xlane.xlu0 %258
    %260 = vadd.xlane.f32.xlu0 %v143
    %v261 = vpop.xlane.xlu0 %260
    %262 = vadd.xlane.f32.xlu0 %v144
    %v263 = vpop.xlane.xlu0 %262
    %264 = vadd.xlane.f32.xlu0 %v145
    %v265 = vpop.xlane.xlu0 %264
    %266 = vadd.xlane.f32.xlu0 %v146
    %v267 = vpop.xlane.xlu0 %266
    %268 = vadd.xlane.f32.xlu0 %v147
    %v269 = vpop.xlane.xlu0 %268
    %270 = vadd.xlane.f32.xlu0 %v148
    %v271 = vpop.xlane.xlu0 %270
    %272 = vadd.xlane.f32.xlu0 %v149
    %v273 = vpop.xlane.xlu0 %272
    %274 = vadd.xlane.f32.xlu0 %v150
    %v275 = vpop.xlane.xlu0 %274
    %276 = vadd.xlane.f32.xlu0 %v151
    %v277 = vpop.xlane.xlu0 %276
    %278 = vadd.xlane.f32.xlu0 %v152
    %v279 = vpop.xlane.xlu0 %278
    %280 = vadd.xlane.f32.xlu0 %v153
    %v281 = vpop.xlane.xlu0 %280
    %v282 = vmax.f32 %v155, 1e-24
    %v283 = vmax.f32 %v157, 1e-24
    %v284 = vmax.f32 %v159, 1e-24
    %v285 = vmax.f32 %v161, 1e-24
    %v286 = vmax.f32 %v163, 1e-24
    %v287 = vmax.f32 %v165, 1e-24
    %v288 = vmax.f32 %v167, 1e-24
    %v289 = vmax.f32 %v169, 1e-24
    %v290 = vmax.f32 %v171, 1e-24
    %v291 = vmax.f32 %v173, 1e-24
    %v292 = vmax.f32 %v175, 1e-24
    %v293 = vmax.f32 %v177, 1e-24
    %v294 = vmax.f32 %v179, 1e-24
    %v295 = vmax.f32 %v181, 1e-24
    %v296 = vmax.f32 %v183, 1e-24
    %v297 = vmax.f32 %v185, 1e-24
    %v298 = vmax.f32 %v187, 1e-24
    %v299 = vmax.f32 %v189, 1e-24
    %v300 = vmax.f32 %v191, 1e-24
    %v301 = vmax.f32 %v193, 1e-24
    %v302 = vmax.f32 %v195, 1e-24
    %v303 = vmax.f32 %v197, 1e-24
    %v304 = vmax.f32 %v199, 1e-24
    %v305 = vmax.f32 %v201, 1e-24
    %v306 = vmax.f32 %v203, 1e-24
    %v307 = vmax.f32 %v205, 1e-24
    %v308 = vmax.f32 %v207, 1e-24
    %v309 = vmax.f32 %v209, 1e-24
    %v310 = vmax.f32 %v211, 1e-24
    %v311 = vmax.f32 %v213, 1e-24
    %v312 = vmax.f32 %v215, 1e-24
    %v313 = vmax.f32 %v217, 1e-24
    %v314 = vmax.f32 %v219, 1e-24
    %v315 = vmax.f32 %v221, 1e-24
    %v316 = vmax.f32 %v223, 1e-24
    %v317 = vmax.f32 %v225, 1e-24
    %v318 = vmax.f32 %v227, 1e-24
    %v319 = vmax.f32 %v229, 1e-24
    %v320 = vmax.f32 %v231, 1e-24
    %v321 = vmax.f32 %v233, 1e-24
    %v322 = vmax.f32 %v235, 1e-24
    %v323 = vmax.f32 %v237, 1e-24
    %v324 = vmax.f32 %v239, 1e-24
    %v325 = vmax.f32 %v241, 1e-24
    %v326 = vmax.f32 %v243, 1e-24
    %v327 = vmax.f32 %v245, 1e-24
    %v328 = vmax.f32 %v247, 1e-24
    %v329 = vmax.f32 %v249, 1e-24
    %v330 = vmax.f32 %v251, 1e-24
    %v331 = vmax.f32 %v253, 1e-24
    %v332 = vmax.f32 %v255, 1e-24
    %v333 = vmax.f32 %v257, 1e-24
    %v334 = vmax.f32 %v259, 1e-24
    %v335 = vmax.f32 %v261, 1e-24
    %v336 = vmax.f32 %v263, 1e-24
    %v337 = vmax.f32 %v265, 1e-24
    %v338 = vmax.f32 %v267, 1e-24
    %v339 = vmax.f32 %v269, 1e-24
    %v340 = vmax.f32 %v271, 1e-24
    %v341 = vmax.f32 %v273, 1e-24
    %v342 = vmax.f32 %v275, 1e-24
    %v343 = vmax.f32 %v277, 1e-24
    %v344 = vmax.f32 %v279, 1e-24
    %v345 = vmax.f32 %v281, 1e-24
    %v346 = vrsqrt.pop %v282
    %v347 = vrsqrt.pop %v283
    %v348 = vrsqrt.pop %v284
    %v349 = vrsqrt.pop %v285
    %v350 = vrsqrt.pop %v286
    %v351 = vrsqrt.pop %v287
    %v352 = vrsqrt.pop %v288
    %v353 = vrsqrt.pop %v289
    %v354 = vrsqrt.pop %v290
    %v355 = vrsqrt.pop %v291
    %v356 = vrsqrt.pop %v292
    %v357 = vrsqrt.pop %v293
    %v358 = vrsqrt.pop %v294
    %v359 = vrsqrt.pop %v295
    %v360 = vrsqrt.pop %v296
    %v361 = vrsqrt.pop %v297
    %v362 = vrsqrt.pop %v298
    %v363 = vrsqrt.pop %v299
    %v364 = vrsqrt.pop %v300
    %v365 = vrsqrt.pop %v301
    %v366 = vrsqrt.pop %v302
    %v367 = vrsqrt.pop %v303
    %v368 = vrsqrt.pop %v304
    %v369 = vrsqrt.pop %v305
    %v370 = vrsqrt.pop %v306
    %v371 = vrsqrt.pop %v307
    %v372 = vrsqrt.pop %v308
    %v373 = vrsqrt.pop %v309
    %v374 = vrsqrt.pop %v310
    %v375 = vrsqrt.pop %v311
    %v376 = vrsqrt.pop %v312
    %v377 = vrsqrt.pop %v313
    %v378 = vrsqrt.pop %v314
    %v379 = vrsqrt.pop %v315
    %v380 = vrsqrt.pop %v316
    %v381 = vrsqrt.pop %v317
    %v382 = vrsqrt.pop %v318
    %v383 = vrsqrt.pop %v319
    %v384 = vrsqrt.pop %v320
    %v385 = vrsqrt.pop %v321
    %v386 = vrsqrt.pop %v322
    %v387 = vrsqrt.pop %v323
    %v388 = vrsqrt.pop %v324
    %v389 = vrsqrt.pop %v325
    %v390 = vrsqrt.pop %v326
    %v391 = vrsqrt.pop %v327
    %v392 = vrsqrt.pop %v328
    %v393 = vrsqrt.pop %v329
    %v394 = vrsqrt.pop %v330
    %v395 = vrsqrt.pop %v331
    %v396 = vrsqrt.pop %v332
    %v397 = vrsqrt.pop %v333
    %v398 = vrsqrt.pop %v334
    %v399 = vrsqrt.pop %v335
    %v400 = vrsqrt.pop %v336
    %v401 = vrsqrt.pop %v337
    %v402 = vrsqrt.pop %v338
    %v403 = vrsqrt.pop %v339
    %v404 = vrsqrt.pop %v340
    %v405 = vrsqrt.pop %v341
    %v406 = vrsqrt.pop %v342
    %v407 = vrsqrt.pop %v343
    %v408 = vrsqrt.pop %v344
    %v409 = vrsqrt.pop %v345
    %v410 = vmul.f32 %v26, %v346
    %v411 = vmul.f32 %v27, %v347
    %v412 = vmul.f32 %v28, %v348
    %v413 = vmul.f32 %v29, %v349
    %v414 = vmul.f32 %v30, %v350
    %v415 = vmul.f32 %v31, %v351
    %v416 = vmul.f32 %v32, %v352
    %v417 = vmul.f32 %v33, %v353
    %v418 = vmul.f32 %v34, %v354
    %v419 = vmul.f32 %v35, %v355
    %v420 = vmul.f32 %v36, %v356
    %v421 = vmul.f32 %v37, %v357
    %v422 = vmul.f32 %v38, %v358
    %v423 = vmul.f32 %v39, %v359
    %v424 = vmul.f32 %v40, %v360
    %v425 = vmul.f32 %v41, %v361
    %v426 = vmul.f32 %v42, %v362
    %v427 = vmul.f32 %v43, %v363
    %v428 = vmul.f32 %v44, %v364
    %v429 = vmul.f32 %v45, %v365
    %v430 = vmul.f32 %v46, %v366
    %v431 = vmul.f32 %v47, %v367
    %v432 = vmul.f32 %v48, %v368
    %v433 = vmul.f32 %v49, %v369
    %v434 = vmul.f32 %v50, %v370
    %v435 = vmul.f32 %v51, %v371
    %v436 = vmul.f32 %v52, %v372
    %v437 = vmul.f32 %v53, %v373
    %v438 = vmul.f32 %v54, %v374
    %v439 = vmul.f32 %v55, %v375
    %v440 = vmul.f32 %v56, %v376
    %v441 = vmul.f32 %v57, %v377
    %v442 = vmul.f32 %v58, %v378
    %v443 = vmul.f32 %v59, %v379
    %v444 = vmul.f32 %v60, %v380
    %v445 = vmul.f32 %v61, %v381
    %v446 = vmul.f32 %v62, %v382
    %v447 = vmul.f32 %v63, %v383
    %v448 = vmul.f32 %v64, %v384
    %v449 = vmul.f32 %v65, %v385
    %v450 = vmul.f32 %v66, %v386
    %v451 = vmul.f32 %v67, %v387
    %v452 = vmul.f32 %v68, %v388
    %v453 = vmul.f32 %v69, %v389
    %v454 = vmul.f32 %v70, %v390
    %v455 = vmul.f32 %v71, %v391
    %v456 = vmul.f32 %v72, %v392
    %v457 = vmul.f32 %v73, %v393
    %v458 = vmul.f32 %v74, %v394
    %v459 = vmul.f32 %v75, %v395
    %v460 = vmul.f32 %v76, %v396
    %v461 = vmul.f32 %v77, %v397
    %v462 = vmul.f32 %v78, %v398
    %v463 = vmul.f32 %v79, %v399
    %v464 = vmul.f32 %v80, %v400
    %v465 = vmul.f32 %v81, %v401
    %v466 = vmul.f32 %v82, %v402
    %v467 = vmul.f32 %v83, %v403
    %v468 = vmul.f32 %v84, %v404
    %v469 = vmul.f32 %v85, %v405
    %v470 = vmul.f32 %v86, %v406
    %v471 = vmul.f32 %v87, %v407
    %v472 = vmul.f32 %v88, %v408
    %v473 = vmul.f32 %v89, %v409
    %474 = vst [vmem:[#allocation5] sm:$0xff] %v410
    %475 = vst [vmem:[#allocation5 + $0x8] sm:$0xff] %v411
    %476 = vst [vmem:[#allocation5 + $0x10] sm:$0xff] %v412
    %477 = vst [vmem:[#allocation5 + $0x18] sm:$0xff] %v413
    %478 = vst [vmem:[#allocation5 + $0x20] sm:$0xff] %v414
    %479 = vst [vmem:[#allocation5 + $0x28] sm:$0xff] %v415
    %480 = vst [vmem:[#allocation5 + $0x30] sm:$0xff] %v416
    %481 = vst [vmem:[#allocation5 + $0x38] sm:$0xff] %v417
    %482 = vst [vmem:[#allocation5 + $0x40] sm:$0xff] %v418
    %483 = vst [vmem:[#allocation5 + $0x48] sm:$0xff] %v419
    %484 = vst [vmem:[#allocation5 + $0x50] sm:$0xff] %v420
    %485 = vst [vmem:[#allocation5 + $0x58] sm:$0xff] %v421
    %486 = vst [vmem:[#allocation5 + $0x60] sm:$0xff] %v422
    %487 = vst [vmem:[#allocation5 + $0x68] sm:$0xff] %v423
    %488 = vst [vmem:[#allocation5 + $0x70] sm:$0xff] %v424
    %489 = vst [vmem:[#allocation5 + $0x78] sm:$0xff] %v425
    %490 = vst [vmem:[#allocation5 + $0x80] sm:$0xff] %v426
    %491 = vst [vmem:[#allocation5 + $0x88] sm:$0xff] %v427
    %492 = vst [vmem:[#allocation5 + $0x90] sm:$0xff] %v428
    %493 = vst [vmem:[#allocation5 + $0x98] sm:$0xff] %v429
    %494 = vst [vmem:[#allocation5 + $0xa0] sm:$0xff] %v430
    %495 = vst [vmem:[#allocation5 + $0xa8] sm:$0xff] %v431
    %496 = vst [vmem:[#allocation5 + $0xb0] sm:$0xff] %v432
    %497 = vst [vmem:[#allocation5 + $0xb8] sm:$0xff] %v433
    %498 = vst [vmem:[#allocation5 + $0xc0] sm:$0xff] %v434
    %499 = vst [vmem:[#allocation5 + $0xc8] sm:$0xff] %v435
    %500 = vst [vmem:[#allocation5 + $0xd0] sm:$0xff] %v436
    %501 = vst [vmem:[#allocation5 + $0xd8] sm:$0xff] %v437
    %502 = vst [vmem:[#allocation5 + $0xe0] sm:$0xff] %v438
    %503 = vst [vmem:[#allocation5 + $0xe8] sm:$0xff] %v439
    %504 = vst [vmem:[#allocation5 + $0xf0] sm:$0xff] %v440
    %505 = vst [vmem:[#allocation5 + $0xf8] sm:$0xff] %v441
    %506 = vst [vmem:[#allocation5 + $0x100] sm:$0xff] %v442
    %507 = vst [vmem:[#allocation5 + $0x108] sm:$0xff] %v443
    %508 = vst [vmem:[#allocation5 + $0x110] sm:$0xff] %v444
    %509 = vst [vmem:[#allocation5 + $0x118] sm:$0xff] %v445
    %510 = vst [vmem:[#allocation5 + $0x120] sm:$0xff] %v446
    %511 = vst [vmem:[#allocation5 + $0x128] sm:$0xff] %v447
    %512 = vst [vmem:[#allocation5 + $0x130] sm:$0xff] %v448
    %513 = vst [vmem:[#allocation5 + $0x138] sm:$0xff] %v449
    %514 = vst [vmem:[#allocation5 + $0x140] sm:$0xff] %v450
    %515 = vst [vmem:[#allocation5 + $0x148] sm:$0xff] %v451
    %516 = vst [vmem:[#allocation5 + $0x150] sm:$0xff] %v452
    %517 = vst [vmem:[#allocation5 + $0x158] sm:$0xff] %v453
    %518 = vst [vmem:[#allocation5 + $0x160] sm:$0xff] %v454
    %519 = vst [vmem:[#allocation5 + $0x168] sm:$0xff] %v455
    %520 = vst [vmem:[#allocation5 + $0x170] sm:$0xff] %v456
    %521 = vst [vmem:[#allocation5 + $0x178] sm:$0xff] %v457
    %522 = vst [vmem:[#allocation5 + $0x180] sm:$0xff] %v458
    %523 = vst [vmem:[#allocation5 + $0x188] sm:$0xff] %v459
    %524 = vst [vmem:[#allocation5 + $0x190] sm:$0xff] %v460
    %525 = vst [vmem:[#allocation5 + $0x198] sm:$0xff] %v461
    %526 = vst [vmem:[#allocation5 + $0x1a0] sm:$0xff] %v462
    %527 = vst [vmem:[#allocation5 + $0x1a8] sm:$0xff] %v463
    %528 = vst [vmem:[#allocation5 + $0x1b0] sm:$0xff] %v464
    %529 = vst [vmem:[#allocation5 + $0x1b8] sm:$0xff] %v465
    %530 = vst [vmem:[#allocation5 + $0x1c0] sm:$0xff] %v466
    %531 = vst [vmem:[#allocation5 + $0x1c8] sm:$0xff] %v467
    %532 = vst [vmem:[#allocation5 + $0x1d0] sm:$0xff] %v468
    %533 = vst [vmem:[#allocation5 + $0x1d8] sm:$0xff] %v469
    %534 = vst [vmem:[#allocation5 + $0x1e0] sm:$0xff] %v470
    %535 = vst [vmem:[#allocation5 + $0x1e8] sm:$0xff] %v471
    %536 = vst [vmem:[#allocation5 + $0x1f0] sm:$0xff] %v472
    %537 = vst [vmem:[#allocation5 + $0x1f8] sm:$0xff] %v473
    %v538 = vmul.f32 %v410, 3.1622777
    %v539 = vmul.f32 %v411, 3.1622777
    %v540 = vmul.f32 %v412, 3.1622777
    %v541 = vmul.f32 %v413, 3.1622777
    %v542 = vmul.f32 %v414, 3.1622777
    %v543 = vmul.f32 %v415, 3.1622777
    %v544 = vmul.f32 %v416, 3.1622777
    %v545 = vmul.f32 %v417, 3.1622777
    %v546 = vmul.f32 %v418, 3.1622777
    %v547 = vmul.f32 %v419, 3.1622777
    %v548 = vmul.f32 %v420, 3.1622777
    %v549 = vmul.f32 %v421, 3.1622777
    %v550 = vmul.f32 %v422, 3.1622777
    %v551 = vmul.f32 %v423, 3.1622777
    %v552 = vmul.f32 %v424, 3.1622777
    %v553 = vmul.f32 %v425, 3.1622777
    %v554 = vmul.f32 %v426, 3.1622777
    %v555 = vmul.f32 %v427, 3.1622777
    %v556 = vmul.f32 %v428, 3.1622777
    %v557 = vmul.f32 %v429, 3.1622777
    %v558 = vmul.f32 %v430, 3.1622777
    %v559 = vmul.f32 %v431, 3.1622777
    %v560 = vmul.f32 %v432, 3.1622777
    %v561 = vmul.f32 %v433, 3.1622777
    %v562 = vmul.f32 %v434, 3.1622777
    %v563 = vmul.f32 %v435, 3.1622777
    %v564 = vmul.f32 %v436, 3.1622777
    %v565 = vmul.f32 %v437, 3.1622777
    %v566 = vmul.f32 %v438, 3.1622777
    %v567 = vmul.f32 %v439, 3.1622777
    %v568 = vmul.f32 %v440, 3.1622777
    %v569 = vmul.f32 %v441, 3.1622777
    %v570 = vmul.f32 %v442, 3.1622777
    %v571 = vmul.f32 %v443, 3.1622777
    %v572 = vmul.f32 %v444, 3.1622777
    %v573 = vmul.f32 %v445, 3.1622777
    %v574 = vmul.f32 %v446, 3.1622777
    %v575 = vmul.f32 %v447, 3.1622777
    %v576 = vmul.f32 %v448, 3.1622777
    %v577 = vmul.f32 %v449, 3.1622777
    %v578 = vmul.f32 %v450, 3.1622777
    %v579 = vmul.f32 %v451, 3.1622777
    %v580 = vmul.f32 %v452, 3.1622777
    %v581 = vmul.f32 %v453, 3.1622777
    %v582 = vmul.f32 %v454, 3.1622777
    %v583 = vmul.f32 %v455, 3.1622777
    %v584 = vmul.f32 %v456, 3.1622777
    %v585 = vmul.f32 %v457, 3.1622777
    %v586 = vmul.f32 %v458, 3.1622777
    %v587 = vmul.f32 %v459, 3.1622777
    %v588 = vmul.f32 %v460, 3.1622777
    %v589 = vmul.f32 %v461, 3.1622777
    %v590 = vmul.f32 %v462, 3.1622777
    %v591 = vmul.f32 %v463, 3.1622777
    %v592 = vmul.f32 %v464, 3.1622777
    %v593 = vmul.f32 %v465, 3.1622777
    %v594 = vmul.f32 %v466, 3.1622777
    %v595 = vmul.f32 %v467, 3.1622777
    %v596 = vmul.f32 %v468, 3.1622777
    %v597 = vmul.f32 %v469, 3.1622777
    %v598 = vmul.f32 %v470, 3.1622777
    %v599 = vmul.f32 %v471, 3.1622777
    %v600 = vmul.f32 %v472, 3.1622777
    %v601 = vmul.f32 %v473, 3.1622777
    %602 = vst [vmem:[#allocation6] sm:$0xff] %v538
    %603 = vst [vmem:[#allocation6 + $0x8] sm:$0xff] %v539
    %604 = vst [vmem:[#allocation6 + $0x10] sm:$0xff] %v540
    %605 = vst [vmem:[#allocation6 + $0x18] sm:$0xff] %v541
    %606 = vst [vmem:[#allocation6 + $0x20] sm:$0xff] %v542
    %607 = vst [vmem:[#allocation6 + $0x28] sm:$0xff] %v543
    %608 = vst [vmem:[#allocation6 + $0x30] sm:$0xff] %v544
    %609 = vst [vmem:[#allocation6 + $0x38] sm:$0xff] %v545
    %610 = vst [vmem:[#allocation6 + $0x40] sm:$0xff] %v546
    %611 = vst [vmem:[#allocation6 + $0x48] sm:$0xff] %v547
    %612 = vst [vmem:[#allocation6 + $0x50] sm:$0xff] %v548
    %613 = vst [vmem:[#allocation6 + $0x58] sm:$0xff] %v549
    %614 = vst [vmem:[#allocation6 + $0x60] sm:$0xff] %v550
    %615 = vst [vmem:[#allocation6 + $0x68] sm:$0xff] %v551
    %616 = vst [vmem:[#allocation6 + $0x70] sm:$0xff] %v552
    %617 = vst [vmem:[#allocation6 + $0x78] sm:$0xff] %v553
    %618 = vst [vmem:[#allocation6 + $0x80] sm:$0xff] %v554
    %619 = vst [vmem:[#allocation6 + $0x88] sm:$0xff] %v555
    %620 = vst [vmem:[#allocation6 + $0x90] sm:$0xff] %v556
    %621 = vst [vmem:[#allocation6 + $0x98] sm:$0xff] %v557
    %622 = vst [vmem:[#allocation6 + $0xa0] sm:$0xff] %v558
    %623 = vst [vmem:[#allocation6 + $0xa8] sm:$0xff] %v559
    %624 = vst [vmem:[#allocation6 + $0xb0] sm:$0xff] %v560
    %625 = vst [vmem:[#allocation6 + $0xb8] sm:$0xff] %v561
    %626 = vst [vmem:[#allocation6 + $0xc0] sm:$0xff] %v562
    %627 = vst [vmem:[#allocation6 + $0xc8] sm:$0xff] %v563
    %628 = vst [vmem:[#allocation6 + $0xd0] sm:$0xff] %v564
    %629 = vst [vmem:[#allocation6 + $0xd8] sm:$0xff] %v565
    %630 = vst [vmem:[#allocation6 + $0xe0] sm:$0xff] %v566
    %631 = vst [vmem:[#allocation6 + $0xe8] sm:$0xff] %v567
    %632 = vst [vmem:[#allocation6 + $0xf0] sm:$0xff] %v568
    %633 = vst [vmem:[#allocation6 + $0xf8] sm:$0xff] %v569
    %634 = vst [vmem:[#allocation6 + $0x100] sm:$0xff] %v570
    %635 = vst [vmem:[#allocation6 + $0x108] sm:$0xff] %v571
    %636 = vst [vmem:[#allocation6 + $0x110] sm:$0xff] %v572
    %637 = vst [vmem:[#allocation6 + $0x118] sm:$0xff] %v573
    %638 = vst [vmem:[#allocation6 + $0x120] sm:$0xff] %v574
    %639 = vst [vmem:[#allocation6 + $0x128] sm:$0xff] %v575
    %640 = vst [vmem:[#allocation6 + $0x130] sm:$0xff] %v576
    %641 = vst [vmem:[#allocation6 + $0x138] sm:$0xff] %v577
    %642 = vst [vmem:[#allocation6 + $0x140] sm:$0xff] %v578
    %643 = vst [vmem:[#allocation6 + $0x148] sm:$0xff] %v579
    %644 = vst [vmem:[#allocation6 + $0x150] sm:$0xff] %v580
    %645 = vst [vmem:[#allocation6 + $0x158] sm:$0xff] %v581
    %646 = vst [vmem:[#allocation6 + $0x160] sm:$0xff] %v582
    %647 = vst [vmem:[#allocation6 + $0x168] sm:$0xff] %v583
    %648 = vst [vmem:[#allocation6 + $0x170] sm:$0xff] %v584
    %649 = vst [vmem:[#allocation6 + $0x178] sm:$0xff] %v585
    %650 = vst [vmem:[#allocation6 + $0x180] sm:$0xff] %v586
    %651 = vst [vmem:[#allocation6 + $0x188] sm:$0xff] %v587
    %652 = vst [vmem:[#allocation6 + $0x190] sm:$0xff] %v588
    %653 = vst [vmem:[#allocation6 + $0x198] sm:$0xff] %v589
    %654 = vst [vmem:[#allocation6 + $0x1a0] sm:$0xff] %v590
    %655 = vst [vmem:[#allocation6 + $0x1a8] sm:$0xff] %v591
    %656 = vst [vmem:[#allocation6 + $0x1b0] sm:$0xff] %v592
    %657 = vst [vmem:[#allocation6 + $0x1b8] sm:$0xff] %v593
    %658 = vst [vmem:[#allocation6 + $0x1c0] sm:$0xff] %v594
    %659 = vst [vmem:[#allocation6 + $0x1c8] sm:$0xff] %v595
    %660 = vst [vmem:[#allocation6 + $0x1d0] sm:$0xff] %v596
    %661 = vst [vmem:[#allocation6 + $0x1d8] sm:$0xff] %v597
    %662 = vst [vmem:[#allocation6 + $0x1e0] sm:$0xff] %v598
    %663 = vst [vmem:[#allocation6 + $0x1e8] sm:$0xff] %v599
    %664 = vst [vmem:[#allocation6 + $0x1f0] sm:$0xff] %v600
    %665 = vst [vmem:[#allocation6 + $0x1f8] sm:$0xff] %v601
    // Predicated region
    $region10: #{tpu_custom_call.1} parent=1 // pred_check
      _
    $region11: #{tpu_custom_call.1} parent=1 // pred_check_branch
      %667 = sbr.rel (0) target = $region13
    $region12: #{tpu_custom_call.1} parent=1 // pred_region
      %s669 = ssub.s32 8192, 8192
      %670 = vsyncadd [#allocation4], %s669
      %s671 = sshll.u32 [#allocation5], 4
      %s672 = int_to_ptr.vmem [resolvable:$true] %s671
      %677 = dma.vmem_to_hbm [thread:$0]  %s672, 8192, %s1, [#allocation4], 128, 128, 8
    $region13: #{tpu_custom_call.1} parent=1 // pred_fallthru
      _
    // Predicated region
    $region14: #{tpu_custom_call.1} parent=1 // pred_check
      _
    $region15: #{tpu_custom_call.1} parent=1 // pred_check_branch
      %679 = sbr.rel (0) target = $region17
    $region16: #{tpu_custom_call.1} parent=1 // pred_region
      %s681 = ssub.s32 8192, 8192
      %682 = vsyncadd [#allocation7], %s681
      %s683 = sshll.u32 [#allocation6], 4
      %s684 = int_to_ptr.vmem [resolvable:$true] %s683
      %689 = dma.vmem_to_hbm [thread:$0]  %s684, 8192, %s2, [#allocation7], 128, 128, 8
    $region17: #{tpu_custom_call.1} parent=1 // pred_fallthru
      _
    // Predicated region
    $region18: #{tpu_custom_call.1} parent=1 // pred_check
      _
    $region19: #{tpu_custom_call.1} parent=1 // pred_check_branch
      %691 = sbr.rel (0) target = $region21
    $region20: #{tpu_custom_call.1} parent=1 // pred_region
      %692 = dma.done [#allocation4], 8192
    $region21: #{tpu_custom_call.1} parent=1 // pred_fallthru
      _
    // Predicated region
    $region22: #{tpu_custom_call.1} parent=1 // pred_check
      _
    $region23: #{tpu_custom_call.1} parent=1 // pred_check_branch
      %694 = sbr.rel (0) target = $region25
    $region24: #{tpu_custom_call.1} parent=1 // pred_region
      %695 = dma.done [#allocation7], 8192
    $region25: #{tpu_custom_call.1} parent=1 // pred_fallthru
      _
    %696 = vsyncpa [#allocation3], 1
    %697 = vsyncpa [#allocation4], 1
    %698 = vsyncpa [#allocation7], 1

</llo_original>
